<compile_context>
chip_gen: v5e
topology: v5e:2x2
jax: 0.10.0
libtpu: 0.0.40
codegen_flags: <defaults>
</compile_context>

<pallas_src>
import functools
import math

import jax
import jax.numpy as jnp
import numpy as np
from jax.experimental import pallas as pl
from jax.experimental.pallas import tpu as pltpu

_LANES = 128
_NUM_STATS = 8  # [Σv+, Σv-, Σv+·p, Σv-·p, Σv+·p², Σv-·p², n+, n-]


def _round_up(x, m):
    return ((int(x) + m - 1) // m) * m


def _pick_sub_rows(tm):
    # Largest sub-chunk (multiple of 8) that divides tm; keeps vreg pressure low.
    for r in (256, 128, 64, 32, 16, 8):
        if tm % r == 0:
            return r
    return tm


def _make_kernel(gamma, eps, weight_scheme, tm, sub_rows):
    gamma = float(gamma)
    eps = float(eps)
    n_sub = tm // sub_rows
    exp_neg_gamma = math.exp(-gamma)

    def kernel(pred_ref, cls_ref, out_ref):
        def body(j, carry):
            r0 = pl.multiple_of(j * sub_rows, sub_rows)
            p = pred_ref[pl.ds(r0, sub_rows), :]                      # (R,128) f32
            c = cls_ref[pl.ds(r0, sub_rows), :].astype(jnp.float32)   # ±1 / 0 pad
            mp = jnp.maximum(c, 0.0)        # positive mask
            mn = jnp.maximum(-c, 0.0)       # negative mask

            if weight_scheme == 'Poly':
                base_p = 1.0 - p + eps
                base_n = p + eps
                if gamma == 1.0:
                    wp, wn = base_p, base_n
                else:
                    wp = jnp.power(base_p, gamma)
                    wn = jnp.power(base_n, gamma)
            else:  # default (weight_scheme None) -> Exp branch of the reference
                t = jnp.exp(gamma * p)                 # shared EUP transcendental
                wp = 1.0 - exp_neg_gamma * t           # = 1 - exp(-gamma*(1-p))
                wn = 1.0 - jnp.exp(-gamma * p)         # exact (no approx recip)

            vp = mp * wp
            vn = mn * wn
            vpp = vp * p
            vnn = vn * p
            upd = (vp, vn, vpp, vnn, vpp * p, vnn * p, mp, mn)
            return tuple(acc + jnp.sum(x, axis=0, keepdims=True)
                         for acc, x in zip(carry, upd))

        init = tuple(jnp.zeros((1, _LANES), jnp.float32) for _ in range(_NUM_STATS))
        stats = jax.lax.fori_loop(0, n_sub, body, init, unroll=(n_sub <= 8))

        # Eight direct lane-dense row stores (no concatenate / sublane shuffles).
        for k in range(_NUM_STATS):
            out_ref[k:k + 1, :] = stats[k]

    return kernel


@functools.partial(
    jax.jit,
    static_argnames=('gamma', 'eps', 'weight_scheme', 'reg_a', 'reg_b', 'block_rows'),
)
def minmax_tpauc_loss(pred, target, a, b, *, gamma=1.0, eps=1e-6,
                      weight_scheme=None, reg_a=0.0, reg_b=0.0, block_rows=2048):
    """MinMaxTPAUC.forward (epoch >= E_k path).

    pred:   float scores, shape [N]
    target: binary labels, shape [N]
    a, b:   learnable auxiliary vectors of the minimax formulation ([10], [8])
    block_rows: rows (of 128 lanes each) per grid tile; the main tunable.
    """
    # TODO(synk): warm-up delegation to `first_stage_loss` when epoch < E_k is
    # host-side control flow and is not implemented here.
    N = pred.shape[0]
    pred = pred.astype(jnp.float32).reshape(-1)
    # int8 class map: +1 pos, -1 neg, 0 for padding (1 byte/elem HBM stream).
    cls = jnp.where(target.reshape(-1) == 1, jnp.int8(1), jnp.int8(-1))

    rows = -(-N // _LANES)
    # tm must be a multiple of 32 (int8 tiling constraint on the 2nd-to-last dim).
    tm = max(32, min(_round_up(block_rows, 32), _round_up(rows, 32)))
    sub_rows = _pick_sub_rows(tm)
    padded_rows = -(-rows // tm) * tm
    padded_n = padded_rows * _LANES
    pad = padded_n - N
    if pad:
        # Padded scores are harmless: their class is 0, so they hit no stat.
        pred = jnp.pad(pred, (0, pad))
        cls = jnp.pad(cls, (0, pad))

    pred2d = pred.reshape(padded_rows, _LANES)
    cls2d = cls.reshape(padded_rows, _LANES)
    num_tiles = padded_rows // tm

    # Compiler params: parallel 1-D grid; raise scoped VMEM only if the tile is
    # large enough to need it (cap at 48 MiB so the same value is v7x-safe).
    dbuf_bytes = 2 * (tm * _LANES * 4 + tm * _LANES * 1) + 2 * _NUM_STATS * _LANES * 4
    cp_kwargs = dict(dimension_semantics=("parallel",))
    if dbuf_bytes > (12 << 20):
        cp_kwargs['vmem_limit_bytes'] = int(min(dbuf_bytes + (8 << 20), 48 << 20))

    n_elems = padded_rows * _LANES
    cost = pl.CostEstimate(
        flops=int(14 * n_elems),
        transcendentals=int(2 * n_elems),
        bytes_accessed=int(5 * n_elems + num_tiles * _NUM_STATS * _LANES * 4),
    )

    partials = pl.pallas_call(
        _make_kernel(gamma, eps, weight_scheme, tm, sub_rows),
        out_shape=jax.ShapeDtypeStruct((num_tiles * _NUM_STATS, _LANES), jnp.float32),
        grid_spec=pltpu.PrefetchScalarGridSpec(
            num_scalar_prefetch=0,
            grid=(num_tiles,),
            in_specs=[
                pl.BlockSpec((tm, _LANES), lambda i: (i, 0)),   # f32 scores tile
                pl.BlockSpec((tm, _LANES), lambda i: (i, 0)),   # int8 class-map tile
            ],
            out_specs=pl.BlockSpec((_NUM_STATS, _LANES), lambda i: (i, 0)),
        ),
        compiler_params=pltpu.CompilerParams(**cp_kwargs),
        cost_estimate=cost,
    )(pred2d, cls2d)

    # Final reduction of lane-dense per-tile partials (tiny, done by XLA).
    sums = jnp.sum(partials.reshape(num_tiles, _NUM_STATS, _LANES), axis=(0, 2))
    s_vp, s_vn, s_vpp, s_vnn, s_vpp2, s_vnn2, n_plus, n_minus = [sums[i] for i in range(8)]
    # Note: counts are f32 sums of exact per-tile integers; exact up to 2^24 per class.

    c_plus = s_vp / n_plus
    c_minus = s_vn / n_minus
    f_plus = s_vpp / n_plus
    f_minus = s_vnn / n_minus
    f_plus_sq = s_vpp2 / n_plus
    f_minus_sq = s_vnn2 / n_minus

    a = a.astype(jnp.float32)
    b = b.astype(jnp.float32)

    def function_w(x, y):
        return 2.0 * x * y - x * x

    def function_v(b_, a1, a2, e, f):
        return function_w(b_, e + f) - function_w(a1, e) - function_w(a2, f)

    loss = (0.5 * function_v(b[0], a[0], a[1], c_plus, c_minus)
            - function_v(a[2], b[1], b[2], c_minus, f_plus)
            + function_v(b[3], a[3], a[4], c_plus, f_minus)
            + 0.5 * function_v(b[4], a[5], a[6], c_minus, f_plus_sq)
            + 0.5 * function_v(b[5], a[7], a[8], c_plus, f_minus_sq)
            - function_v(a[9], b[6], b[7], f_plus, f_minus))
    loss = loss + reg_a * jnp.sum(a * a) - reg_b * jnp.sum(b * b)
    return loss


def _reference(pred, target, a, b, gamma, eps, weight_scheme, reg_a, reg_b):
    pred = np.asarray(pred, dtype=np.float64)
    target = np.asarray(target)
    a = np.asarray(a, dtype=np.float64)
    b = np.asarray(b, dtype=np.float64)
    pred_p = pred[target == 1]
    pred_n = pred[target != 1]
    if weight_scheme == 'Poly':
        v_plus = np.power(1.0 - pred_p + eps, gamma)
        v_minus = np.power(pred_n + eps, gamma)
    else:
        v_plus = 1.0 - np.exp(-gamma * (1.0 - pred_p))
        v_minus = 1.0 - np.exp(-gamma * pred_n)
    c_plus, c_minus = v_plus.mean(), v_minus.mean()
    f_plus, f_minus = (v_plus * pred_p).mean(), (v_minus * pred_n).mean()
    f_plus_sq, f_minus_sq = (v_plus * pred_p ** 2).mean(), (v_minus * pred_n ** 2).mean()

    def w(x, y):
        return 2.0 * x * y - x ** 2

    def v(b_, a1, a2, e, f):
        return w(b_, e + f) - w(a1, e) - w(a2, f)

    loss = (0.5 * v(b[0], a[0], a[1], c_plus, c_minus)
            - v(a[2], b[1], b[2], c_minus, f_plus)
            + v(b[3], a[3], a[4], c_plus, f_minus)
            + 0.5 * v(b[4], a[5], a[6], c_minus, f_plus_sq)
            + 0.5 * v(b[5], a[7], a[8], c_plus, f_minus_sq)
            - v(a[9], b[6], b[7], f_plus, f_minus))
    return loss + reg_a * np.sum(a ** 2) - reg_b * np.sum(b ** 2)


if __name__ == "__main__":
    key = jax.random.PRNGKey(0)
    k1, k2, k3, k4 = jax.random.split(key, 4)

    N = 20000  # not a multiple of 8*128 -> exercises the padding path
    pred = jax.nn.sigmoid(jax.random.normal(k1, (N,), dtype=jnp.float32))
    target = jax.random.bernoulli(k2, p=0.3, shape=(N,)).astype(jnp.int32)
    # Learnable minimax variables (torch inits them to zeros; use small nonzero
    # values so the scalar algebra is actually exercised).
    a = 0.1 * jax.random.normal(k3, (10,), dtype=jnp.float32)
    b = 0.1 * jax.random.normal(k4, (8,), dtype=jnp.float32)

    ref = _reference(np.array(pred), np.array(target), np.array(a), np.array(b),
                     gamma=1.0, eps=1e-6, weight_scheme=None,
                     reg_a=0.01, reg_b=0.005)

    # Small tiles (multi-step grid, multi-chunk path) and default big tiles.
    for br in (32, 2048):
        loss = minmax_tpauc_loss(pred, target, a, b, gamma=1.0, eps=1e-6,
                                 weight_scheme=None, reg_a=0.01, reg_b=0.005,
                                 block_rows=br)
        loss = jax.block_until_ready(loss)
        assert np.allclose(float(loss), float(ref), rtol=2e-5, atol=2e-5), \
            (br, float(loss), float(ref))

    # Exercise the Poly weight scheme once as well.
    ref_poly = _reference(np.array(pred), np.array(target), np.array(a), np.array(b),
                          gamma=2.0, eps=1e-6, weight_scheme='Poly',
                          reg_a=0.01, reg_b=0.005)
    loss_poly = minmax_tpauc_loss(pred, target, a, b, gamma=2.0, eps=1e-6,
                                  weight_scheme='Poly', reg_a=0.01, reg_b=0.005)
    loss_poly = jax.block_until_ready(loss_poly)
    assert np.allclose(float(loss_poly), float(ref_poly), rtol=2e-5, atol=2e-5), \
        (float(loss_poly), float(ref_poly))

    print("KERNEL_OK")
</pallas_src>

<mosaic_0001>
module attributes {stable_mosaic.version = 11 : i64} {
  func.func @kernel(%arg0: i32, %arg1: memref<32x128xf32, #tpu.memory_space<vmem>>, %arg2: memref<32x128xi8, #tpu.memory_space<vmem>>, %arg3: memref<8x128xf32, #tpu.memory_space<vmem>>) attributes {dimension_semantics = [#tpu.dimension_semantics<parallel>], iteration_bounds = array<i64: 5>, scalar_prefetch = 0 : i64, scratch_operands = 0 : i64, tpu.core_type = #tpu.core_type<tc>, window_params = [{transform_indices = @transform_0, window_bounds = array<i64: 32, 128>}, {transform_indices = @transform_1, window_bounds = array<i64: 32, 128>}, {transform_indices = @transform_2, window_bounds = array<i64: 8, 128>}]} {
    %cst = arith.constant 0.000000e+00 : f32
    %0 = vector.broadcast %cst : f32 to vector<1x128xf32>
    %cst_0 = arith.constant 0.000000e+00 : f32
    %1 = vector.broadcast %cst_0 : f32 to vector<1x128xf32>
    %cst_1 = arith.constant 0.000000e+00 : f32
    %2 = vector.broadcast %cst_1 : f32 to vector<1x128xf32>
    %cst_2 = arith.constant 0.000000e+00 : f32
    %3 = vector.broadcast %cst_2 : f32 to vector<1x128xf32>
    %cst_3 = arith.constant 0.000000e+00 : f32
    %4 = vector.broadcast %cst_3 : f32 to vector<1x128xf32>
    %cst_4 = arith.constant 0.000000e+00 : f32
    %5 = vector.broadcast %cst_4 : f32 to vector<1x128xf32>
    %cst_5 = arith.constant 0.000000e+00 : f32
    %6 = vector.broadcast %cst_5 : f32 to vector<1x128xf32>
    %cst_6 = arith.constant 0.000000e+00 : f32
    %7 = vector.broadcast %cst_6 : f32 to vector<1x128xf32>
    %c0_i32 = arith.constant 0 : i32
    %c32_i32 = arith.constant 32 : i32
    %8 = arith.muli %c0_i32, %c32_i32 : i32
    %9 = tpu.assume_multiple %8, 32 : i32
    %10 = arith.index_cast %9 : i32 to index
    %c0 = arith.constant 0 : index
    %11 = vector.load %arg1[%10, %c0] : memref<32x128xf32, #tpu.memory_space<vmem>>, vector<32x128xf32>
    %12 = arith.index_cast %9 : i32 to index
    %c0_7 = arith.constant 0 : index
    %13 = vector.load %arg2[%12, %c0_7] : memref<32x128xi8, #tpu.memory_space<vmem>>, vector<32x128xi8>
    %14 = arith.sitofp %13 : vector<32x128xi8> to vector<32x128xf32>
    %cst_8 = arith.constant 0.000000e+00 : f32
    %15 = vector.broadcast %cst_8 : f32 to vector<32x128xf32>
    %16 = arith.maximumf %14, %15 : vector<32x128xf32>
    %cst_9 = arith.constant 0.000000e+00 : f32
    %17 = vector.broadcast %cst_9 : f32 to vector<32x128xf32>
    %18 = arith.subf %17, %14 : vector<32x128xf32>
    %cst_10 = arith.constant 0.000000e+00 : f32
    %19 = vector.broadcast %cst_10 : f32 to vector<32x128xf32>
    %20 = arith.maximumf %18, %19 : vector<32x128xf32>
    %cst_11 = arith.constant 1.000000e+00 : f32
    %21 = vector.broadcast %cst_11 : f32 to vector<32x128xf32>
    %22 = arith.mulf %21, %11 : vector<32x128xf32>
    %23 = math.exp %22 : vector<32x128xf32>
    %cst_12 = arith.constant 0.36787945 : f32
    %24 = vector.broadcast %cst_12 : f32 to vector<32x128xf32>
    %25 = arith.mulf %24, %23 : vector<32x128xf32>
    %cst_13 = arith.constant 1.000000e+00 : f32
    %26 = vector.broadcast %cst_13 : f32 to vector<32x128xf32>
    %27 = arith.subf %26, %25 : vector<32x128xf32>
    %cst_14 = arith.constant -1.000000e+00 : f32
    %28 = vector.broadcast %cst_14 : f32 to vector<32x128xf32>
    %29 = arith.mulf %28, %11 : vector<32x128xf32>
    %30 = math.exp %29 : vector<32x128xf32>
    %cst_15 = arith.constant 1.000000e+00 : f32
    %31 = vector.broadcast %cst_15 : f32 to vector<32x128xf32>
    %32 = arith.subf %31, %30 : vector<32x128xf32>
    %33 = arith.mulf %16, %27 : vector<32x128xf32>
    %34 = arith.mulf %20, %32 : vector<32x128xf32>
    %35 = arith.mulf %33, %11 : vector<32x128xf32>
    %36 = arith.mulf %34, %11 : vector<32x128xf32>
    %37 = arith.mulf %35, %11 : vector<32x128xf32>
    %38 = arith.mulf %36, %11 : vector<32x128xf32>
    %cst_16 = arith.constant dense<0.000000e+00> : vector<128xf32>
    %39 = vector.multi_reduction <add>, %33, %cst_16 [0] : vector<32x128xf32> to vector<128xf32>
    %40 = vector.shape_cast %39 : vector<128xf32> to vector<1x128xf32>
    %41 = arith.addf %0, %40 : vector<1x128xf32>
    %cst_17 = arith.constant dense<0.000000e+00> : vector<128xf32>
    %42 = vector.multi_reduction <add>, %34, %cst_17 [0] : vector<32x128xf32> to vector<128xf32>
    %43 = vector.shape_cast %42 : vector<128xf32> to vector<1x128xf32>
    %44 = arith.addf %1, %43 : vector<1x128xf32>
    %cst_18 = arith.constant dense<0.000000e+00> : vector<128xf32>
    %45 = vector.multi_reduction <add>, %35, %cst_18 [0] : vector<32x128xf32> to vector<128xf32>
    %46 = vector.shape_cast %45 : vector<128xf32> to vector<1x128xf32>
    %47 = arith.addf %2, %46 : vector<1x128xf32>
    %cst_19 = arith.constant dense<0.000000e+00> : vector<128xf32>
    %48 = vector.multi_reduction <add>, %36, %cst_19 [0] : vector<32x128xf32> to vector<128xf32>
    %49 = vector.shape_cast %48 : vector<128xf32> to vector<1x128xf32>
    %50 = arith.addf %3, %49 : vector<1x128xf32>
    %cst_20 = arith.constant dense<0.000000e+00> : vector<128xf32>
    %51 = vector.multi_reduction <add>, %37, %cst_20 [0] : vector<32x128xf32> to vector<128xf32>
    %52 = vector.shape_cast %51 : vector<128xf32> to vector<1x128xf32>
    %53 = arith.addf %4, %52 : vector<1x128xf32>
    %cst_21 = arith.constant dense<0.000000e+00> : vector<128xf32>
    %54 = vector.multi_reduction <add>, %38, %cst_21 [0] : vector<32x128xf32> to vector<128xf32>
    %55 = vector.shape_cast %54 : vector<128xf32> to vector<1x128xf32>
    %56 = arith.addf %5, %55 : vector<1x128xf32>
    %cst_22 = arith.constant dense<0.000000e+00> : vector<128xf32>
    %57 = vector.multi_reduction <add>, %16, %cst_22 [0] : vector<32x128xf32> to vector<128xf32>
    %58 = vector.shape_cast %57 : vector<128xf32> to vector<1x128xf32>
    %59 = arith.addf %6, %58 : vector<1x128xf32>
    %cst_23 = arith.constant dense<0.000000e+00> : vector<128xf32>
    %60 = vector.multi_reduction <add>, %20, %cst_23 [0] : vector<32x128xf32> to vector<128xf32>
    %61 = vector.shape_cast %60 : vector<128xf32> to vector<1x128xf32>
    %62 = arith.addf %7, %61 : vector<1x128xf32>
    %c1_i32 = arith.constant 1 : i32
    %c0_24 = arith.constant 0 : index
    %c0_25 = arith.constant 0 : index
    %63 = vector.load %arg3[%c0_24, %c0_25] : memref<8x128xf32, #tpu.memory_space<vmem>>, vector<1x128xf32>
    tpu.vector_store %arg3[%c0_24, %c0_25], %41 {strides = array<i32>} : memref<8x128xf32, #tpu.memory_space<vmem>>, vector<1x128xf32>,
    %c1 = arith.constant 1 : index
    %c0_26 = arith.constant 0 : index
    %64 = vector.load %arg3[%c1, %c0_26] : memref<8x128xf32, #tpu.memory_space<vmem>>, vector<1x128xf32>
    tpu.vector_store %arg3[%c1, %c0_26], %44 {strides = array<i32>} : memref<8x128xf32, #tpu.memory_space<vmem>>, vector<1x128xf32>,
    %c2 = arith.constant 2 : index
    %c0_27 = arith.constant 0 : index
    %65 = vector.load %arg3[%c2, %c0_27] : memref<8x128xf32, #tpu.memory_space<vmem>>, vector<1x128xf32>
    tpu.vector_store %arg3[%c2, %c0_27], %47 {strides = array<i32>} : memref<8x128xf32, #tpu.memory_space<vmem>>, vector<1x128xf32>,
    %c3 = arith.constant 3 : index
    %c0_28 = arith.constant 0 : index
    %66 = vector.load %arg3[%c3, %c0_28] : memref<8x128xf32, #tpu.memory_space<vmem>>, vector<1x128xf32>
    tpu.vector_store %arg3[%c3, %c0_28], %50 {strides = array<i32>} : memref<8x128xf32, #tpu.memory_space<vmem>>, vector<1x128xf32>,
    %c4 = arith.constant 4 : index
    %c0_29 = arith.constant 0 : index
    %67 = vector.load %arg3[%c4, %c0_29] : memref<8x128xf32, #tpu.memory_space<vmem>>, vector<1x128xf32>
    tpu.vector_store %arg3[%c4, %c0_29], %53 {strides = array<i32>} : memref<8x128xf32, #tpu.memory_space<vmem>>, vector<1x128xf32>,
    %c5 = arith.constant 5 : index
    %c0_30 = arith.constant 0 : index
    %68 = vector.load %arg3[%c5, %c0_30] : memref<8x128xf32, #tpu.memory_space<vmem>>, vector<1x128xf32>
    tpu.vector_store %arg3[%c5, %c0_30], %56 {strides = array<i32>} : memref<8x128xf32, #tpu.memory_space<vmem>>, vector<1x128xf32>,
    %c6 = arith.constant 6 : index
    %c0_31 = arith.constant 0 : index
    %69 = vector.load %arg3[%c6, %c0_31] : memref<8x128xf32, #tpu.memory_space<vmem>>, vector<1x128xf32>
    tpu.vector_store %arg3[%c6, %c0_31], %59 {strides = array<i32>} : memref<8x128xf32, #tpu.memory_space<vmem>>, vector<1x128xf32>,
    %c7 = arith.constant 7 : index
    %c0_32 = arith.constant 0 : index
    %70 = vector.load %arg3[%c7, %c0_32] : memref<8x128xf32, #tpu.memory_space<vmem>>, vector<1x128xf32>
    tpu.vector_store %arg3[%c7, %c0_32], %62 {strides = array<i32>} : memref<8x128xf32, #tpu.memory_space<vmem>>, vector<1x128xf32>,
    return
  }
  func.func @transform_0(%arg0: i32) -> (i32, i32) {
    %c0_i32 = arith.constant 0 : i32
    %c0_i32_0 = arith.constant 0 : i32
    return %arg0, %c0_i32 : i32, i32
  }
  func.func @transform_1(%arg0: i32) -> (i32, i32) {
    %c0_i32 = arith.constant 0 : i32
    %c0_i32_0 = arith.constant 0 : i32
    return %arg0, %c0_i32 : i32, i32
  }
  func.func @transform_2(%arg0: i32) -> (i32, i32) {
    %c0_i32 = arith.constant 0 : i32
    %c0_i32_0 = arith.constant 0 : i32
    return %arg0, %c0_i32 : i32, i32
  }
}

</mosaic_0001>

<llo_original>
// kernel: minmax_tpauc_loss.1
$region0: #{minmax_tpauc_loss.1}
  #allocation0 [shape = 'u32[]', space=smem, size = 0x4, offset = 0x4, fixed_abs, tag = 'smem constant byte address 0x4 - core index']
  #allocation1 [shape = 'u32[72,128]{1,0:T(1,128)}', space=vmem, size = 0x9000, scoped, tag = 'internal scratch']
  %s0 = inlined_call_operand.vmem [shape: f32[160,128], index: 0, kind: input, shape index: {}]
  %s1 = inlined_call_operand.vmem [shape: s8[160,128], index: 1, kind: input, shape index: {}]
  %s2 = inlined_call_operand.vmem [shape: f32[40,128], index: 2, kind: output, shape index: {}]
  %s3 = sld [smem:[#allocation0]]
  $region41: #{minmax_tpauc_loss.1} parent=0
    _
  %s5 = ssub.s32 1, %s3
  %s6 = scalar_select 0, %s5, %s3
  loop: start=0, step=1, limit=7
  $region2: #{minmax_tpauc_loss.1} parent=0 // loop_pre_header
    _
  $region3: #{minmax_tpauc_loss.1} parent=0 // loop_header
    %s8 = sphi 0, %s12
    %p9 = scmp.ge.s32.totalorder %s8, 7
    %s18 = sphi 0, %s20
    %s21 = sphi 0, %s18
    %s22 = sphi 0, %s21
    %s38 = sphi 0, %s22
    %s44 = sphi 0, %s46
    %s47 = sphi 0, %s44
    %s48 = sphi 0, %s47
    %s64 = sphi 0, %s48
    %s70 = sphi 0, %s72
    %s73 = sphi 0, %s70
    %s74 = sphi 0, %s73
    %s90 = sphi 0, %s74
  $region4: #{minmax_tpauc_loss.1} parent=0 // loop_header_branch
    %11 = sbr.rel (%p9) target = $region8
  $region5: #{minmax_tpauc_loss.1} parent=0 // loop_body
    %s13 = ssub.s32 %s8, 1
    %s14 = ssub.s32 %s8, 2
    %s15 = sadd.s32 %s8, 1
    %s16 = ssub.s32 %s8, %s15
    %p17 = scmp.eq.s32.totalorder %s16, 0
    %s19 = sadd.s32 %s18, 1
    %s20 = scalar_select %p17, %s18, %s19
    %p23 = pneg %p17
    %p24 = scmp.eq.s32.totalorder %s8, 4
    %p25 = por %p23, %p24
    %p26 = scmp.ne.s32.totalorder %s18, %s21
    %p27 = scmp.eq.s32.totalorder %s8, 0
    %p28 = por %p26, %p27
    %p29 = scmp.ne.s32.totalorder %s18, %s21
    %p30 = scmp.eq.s32.totalorder %s13, 4
    %p31 = por %p29, %p30
    %p32 = scmp.ne.s32.totalorder %s21, %s22
    %p33 = scmp.eq.s32.totalorder %s13, 0
    %p34 = por %p32, %p33
    %p35 = scmp.ne.s32.totalorder %s21, %s22
    %p36 = scmp.eq.s32.totalorder %s14, 4
    %p37 = por %p35, %p36
    %p39 = scmp.ne.s32.totalorder %s22, %s38
    %p40 = scmp.eq.s32.totalorder %s14, 0
    %p41 = por %p39, %p40
    %s42 = ssub.s32 %s8, %s15
    %p43 = scmp.eq.s32.totalorder %s42, 0
    %s45 = sadd.s32 %s44, 1
    %s46 = scalar_select %p43, %s44, %s45
    %p49 = pneg %p43
    %p50 = scmp.eq.s32.totalorder %s8, 4
    %p51 = por %p49, %p50
    %p52 = scmp.ne.s32.totalorder %s44, %s47
    %p53 = scmp.eq.s32.totalorder %s8, 0
    %p54 = por %p52, %p53
    %p55 = scmp.ne.s32.totalorder %s44, %s47
    %p56 = scmp.eq.s32.totalorder %s13, 4
    %p57 = por %p55, %p56
    %p58 = scmp.ne.s32.totalorder %s47, %s48
    %p59 = scmp.eq.s32.totalorder %s13, 0
    %p60 = por %p58, %p59
    %p61 = scmp.ne.s32.totalorder %s47, %s48
    %p62 = scmp.eq.s32.totalorder %s14, 4
    %p63 = por %p61, %p62
    %p65 = scmp.ne.s32.totalorder %s48, %s64
    %p66 = scmp.eq.s32.totalorder %s14, 0
    %p67 = por %p65, %p66
    %s68 = ssub.s32 %s8, %s15
    %p69 = scmp.eq.s32.totalorder %s68, 0
    %s71 = sadd.s32 %s70, 1
    %s72 = scalar_select %p69, %s70, %s71
    %p75 = pneg %p69
    %p76 = scmp.eq.s32.totalorder %s8, 4
    %p77 = por %p75, %p76
    %p78 = scmp.ne.s32.totalorder %s70, %s73
    %p79 = scmp.eq.s32.totalorder %s8, 0
    %p80 = por %p78, %p79
    %p81 = scmp.ne.s32.totalorder %s70, %s73
    %p82 = scmp.eq.s32.totalorder %s13, 4
    %p83 = por %p81, %p82
    %p84 = scmp.ne.s32.totalorder %s73, %s74
    %p85 = scmp.eq.s32.totalorder %s13, 0
    %p86 = por %p84, %p85
    %p87 = scmp.ne.s32.totalorder %s73, %s74
    %p88 = scmp.eq.s32.totalorder %s14, 4
    %p89 = por %p87, %p88
    %p91 = scmp.ne.s32.totalorder %s74, %s90
    %p92 = scmp.eq.s32.totalorder %s14, 0
    %p93 = por %p91, %p92
    %p94 = scmp.le.s32.totalorder 1, %s8
    %p95 = scmp.lt.s32.totalorder %s8, 6
    %p96 = pnand %p94, %p95
    %p97 = pneg %p96
    // Predicated region
    $region9: #{minmax_tpauc_loss.1} parent=5 // pred_check
      _
    $region10: #{minmax_tpauc_loss.1} parent=5 // pred_check_branch
      %99 = sbr.rel (%p96) target = $region12
    $region11: #{minmax_tpauc_loss.1} parent=5 // pred_region
      %s100 = ssub.s32 %s8, 1
    $region12: #{minmax_tpauc_loss.1} parent=5 // pred_fallthru
      _
    %p101 = scmp.lt.s32.totalorder %s8, 5
    // Predicated region
    $region13: #{minmax_tpauc_loss.1} parent=5 // pred_check
      %p102 = pneg %p101
    $region14: #{minmax_tpauc_loss.1} parent=5 // pred_check_branch
      %104 = sbr.rel (%p102) target = $region16
    $region15: #{minmax_tpauc_loss.1} parent=5 // pred_region
      // Predicated region
      $region17: #{minmax_tpauc_loss.1} parent=15 // pred_check
        %p105 = pneg %p28
      $region18: #{minmax_tpauc_loss.1} parent=15 // pred_check_branch
        %107 = sbr.rel (%p105) target = $region20
      $region19: #{minmax_tpauc_loss.1} parent=15 // pred_region
        %s108 = smul.u32 4, %s8
        %p109 = scmp.lt.s32.totalorder %s108, 19
        %s110 = scalar_select %p109, %s108, 19
        %s111 = smul.addr %s110, 8
        %s112 = scalar_lea.vmem %s0, %s111
        %s113 = smul.u32 4, %s8
      $region20: #{minmax_tpauc_loss.1} parent=15 // pred_fallthru
        _
      // Predicated region
      $region21: #{minmax_tpauc_loss.1} parent=15 // pred_check
        %p114 = pneg %p54
      $region22: #{minmax_tpauc_loss.1} parent=15 // pred_check_branch
        %116 = sbr.rel (%p114) target = $region24
      $region23: #{minmax_tpauc_loss.1} parent=15 // pred_region
        %p117 = scmp.lt.s32.totalorder %s8, 4
        %s118 = scalar_select %p117, %s8, 4
        %s119 = smul.addr %s118, 8
        %s120 = scalar_lea.vmem %s1, %s119
      $region24: #{minmax_tpauc_loss.1} parent=15 // pred_fallthru
        _
    $region16: #{minmax_tpauc_loss.1} parent=5 // pred_fallthru
      _
    %p121 = scmp.le.s32.totalorder 1, %s8
    %p122 = scmp.lt.s32.totalorder %s8, 6
    %p123 = pnand %p121, %p122
    %p124 = pneg %p123
    // Predicated region
    $region25: #{minmax_tpauc_loss.1} parent=5 // pred_check
      _
    $region26: #{minmax_tpauc_loss.1} parent=5 // pred_check_branch
      %126 = sbr.rel (%p123) target = $region28
    $region27: #{minmax_tpauc_loss.1} parent=5 // pred_region
      %s127 = ssub.s32 %s8, 1
      %s128 = smul.u32 4, %s13
      %p129 = scmp.lt.s32.totalorder %s128, 19
      %s130 = scalar_select %p129, %s128, 19
      %s131 = smul.addr %s130, 8
      %s132 = scalar_lea.vmem %s0, %s131
      %p133 = pneg %p34
      %p134 = pneg %p31
      %p135 = scmp.lt.s32.totalorder %s13, 4
      %s136 = scalar_select %p135, %s13, 4
      %s137 = smul.addr %s136, 8
      %s138 = scalar_lea.vmem %s1, %s137
      %p139 = pneg %p60
      %p140 = pneg %p57
      %p141 = pneg %p86
      %p142 = pneg %p83
      %p143 = scmp.lt.s32.totalorder %s13, 4
      %s144 = scalar_select %p143, %s13, 4
      %s145 = smul.addr %s144, 8
      %s146 = scalar_lea.vmem %s2, %s145
      %s147 = smul.u32 4, %s13
      %p148 = scmp.lt.s32.totalorder %s147, 19
      %s149 = scalar_select %p148, %s147, 19
      %s150 = smul.addr %s149, 8
      %s151 = scalar_lea.vmem %s0, %s150
      %s152 = smul.u32 4, %s13
      %p153 = scmp.lt.s32.totalorder %s13, 4
      %s154 = scalar_select %p153, %s13, 4
      %s155 = smul.addr %s154, 8
      %s156 = scalar_lea.vmem %s1, %s155
      %p157 = scmp.lt.s32.totalorder %s13, 4
      %s158 = scalar_select %p157, %s13, 4
      %s159 = smul.addr %s158, 8
      %s160 = scalar_lea.vmem %s2, %s159
      %v161 = vld [vmem:[%s151] sm:$0xff]
      %v162 = vld [vmem:[%s151 + $0x8] sm:$0xff]
      %v163 = vld [vmem:[%s151 + $0x10] sm:$0xff]
      %v164 = vld [vmem:[%s151 + $0x18] sm:$0xff]
      %v165 = vld [vmem:[%s156] sm:$0xff]
      %v166 = vunpack.c.0.s8 %v165
      %v167 = vunpack.c.1.s8 %v165
      %v168 = vunpack.c.2.s8 %v165
      %v169 = vunpack.c.3.s8 %v165
      %v170 = vcvt.s32.f32 %v166
      %v171 = vcvt.s32.f32 %v167
      %v172 = vcvt.s32.f32 %v168
      %v173 = vcvt.s32.f32 %v169
      %v174 = vmax.f32 %v170, 0.0
      %v175 = vmax.f32 %v171, 0.0
      %v176 = vmax.f32 %v172, 0.0
      %v177 = vmax.f32 %v173, 0.0
      %v178 = vsub.f32 0.0, %v170
      %v179 = vsub.f32 0.0, %v171
      %v180 = vsub.f32 0.0, %v172
      %v181 = vsub.f32 0.0, %v173
      %v182 = vmax.f32 %v178, 0.0
      %v183 = vmax.f32 %v179, 0.0
      %v184 = vmax.f32 %v180, 0.0
      %v185 = vmax.f32 %v181, 0.0
      %v186 = vmul.f32 %v161, 1.442695
      %v187 = vpow.pop %v186
      %v188 = vmul.f32 %v162, 1.442695
      %v189 = vpow.pop %v188
      %v190 = vmul.f32 %v163, 1.442695
      %v191 = vpow.pop %v190
      %v192 = vmul.f32 %v164, 1.442695
      %v193 = vpow.pop %v192
      %v194 = vmul.f32 %v187, 0.36787945
      %v195 = vmul.f32 %v189, 0.36787945
      %v196 = vmul.f32 %v191, 0.36787945
      %v197 = vmul.f32 %v193, 0.36787945
      %v198 = vsub.f32 1.0, %v194
      %v199 = vsub.f32 1.0, %v195
      %v200 = vsub.f32 1.0, %v196
      %v201 = vsub.f32 1.0, %v197
      %v202 = vmul.f32 %v161, -1.0
      %v203 = vmul.f32 %v162, -1.0
      %v204 = vmul.f32 %v163, -1.0
      %v205 = vmul.f32 %v164, -1.0
      %v206 = vmul.f32 %v202, 1.442695
      %v207 = vpow.pop %v206
      %v208 = vmul.f32 %v203, 1.442695
      %v209 = vpow.pop %v208
      %v210 = vmul.f32 %v204, 1.442695
      %v211 = vpow.pop %v210
      %v212 = vmul.f32 %v205, 1.442695
      %v213 = vpow.pop %v212
      %v214 = vsub.f32 1.0, %v207
      %v215 = vsub.f32 1.0, %v209
      %v216 = vsub.f32 1.0, %v211
      %v217 = vsub.f32 1.0, %v213
      %v218 = vmul.f32 %v174, %v198
      %v219 = vmul.f32 %v175, %v199
      %v220 = vmul.f32 %v176, %v200
      %v221 = vmul.f32 %v177, %v201
      %v222 = vmul.f32 %v182, %v214
      %v223 = vmul.f32 %v183, %v215
      %v224 = vmul.f32 %v184, %v216
      %v225 = vmul.f32 %v185, %v217
      %v226 = vmul.f32 %v218, %v161
      %v227 = vmul.f32 %v219, %v162
      %v228 = vmul.f32 %v220, %v163
      %v229 = vmul.f32 %v221, %v164
      %v230 = vmul.f32 %v222, %v161
      %v231 = vmul.f32 %v223, %v162
      %v232 = vmul.f32 %v224, %v163
      %v233 = vmul.f32 %v225, %v164
      %v234 = vmul.f32 %v226, %v161
      %v235 = vmul.f32 %v227, %v162
      %v236 = vmul.f32 %v228, %v163
      %v237 = vmul.f32 %v229, %v164
      %v238 = vmul.f32 %v230, %v161
      %v239 = vmul.f32 %v231, %v162
      %v240 = vmul.f32 %v232, %v163
      %v241 = vmul.f32 %v233, %v164
      %v242 = vadd.f32 %v218, %v219
      %v243 = vadd.f32 %v242, %v220
      %v244 = vadd.f32 %v243, %v221
      %v245 = vrot.slane %v244, 4
      %v246 = vadd.f32 %v244, %v245
      %v247 = vrot.slane %v246, 2
      %v248 = vadd.f32 %v246, %v247
      %v249 = vrot.slane %v248, 1
      %v250 = vadd.f32 %v248, %v249
      %v251 = vadd.f32 %v250, 0.0
      %v252 = vadd.f32 %v222, %v223
      %v253 = vadd.f32 %v252, %v224
      %v254 = vadd.f32 %v253, %v225
      %v255 = vrot.slane %v254, 4
      %v256 = vadd.f32 %v254, %v255
      %v257 = vrot.slane %v256, 2
      %v258 = vadd.f32 %v256, %v257
      %v259 = vrot.slane %v258, 1
      %v260 = vadd.f32 %v258, %v259
      %v261 = vadd.f32 %v260, 0.0
      %v262 = vadd.f32 %v226, %v227
      %v263 = vadd.f32 %v262, %v228
      %v264 = vadd.f32 %v263, %v229
      %v265 = vrot.slane %v264, 4
      %v266 = vadd.f32 %v264, %v265
      %v267 = vrot.slane %v266, 2
      %v268 = vadd.f32 %v266, %v267
      %v269 = vrot.slane %v268, 1
      %v270 = vadd.f32 %v268, %v269
      %v271 = vadd.f32 %v270, 0.0
      %v272 = vadd.f32 %v230, %v231
      %v273 = vadd.f32 %v272, %v232
      %v274 = vadd.f32 %v273, %v233
      %v275 = vrot.slane %v274, 4
      %v276 = vadd.f32 %v274, %v275
      %v277 = vrot.slane %v276, 2
      %v278 = vadd.f32 %v276, %v277
      %v279 = vrot.slane %v278, 1
      %v280 = vadd.f32 %v278, %v279
      %v281 = vadd.f32 %v280, 0.0
      %v282 = vadd.f32 %v234, %v235
      %v283 = vadd.f32 %v282, %v236
      %v284 = vadd.f32 %v283, %v237
      %v285 = vrot.slane %v284, 4
      %v286 = vadd.f32 %v284, %v285
      %v287 = vrot.slane %v286, 2
      %v288 = vadd.f32 %v286, %v287
      %v289 = vrot.slane %v288, 1
      %v290 = vadd.f32 %v288, %v289
      %v291 = vadd.f32 %v290, 0.0
      %v292 = vadd.f32 %v238, %v239
      %v293 = vadd.f32 %v292, %v240
      %v294 = vadd.f32 %v293, %v241
      %v295 = vrot.slane %v294, 4
      %v296 = vadd.f32 %v294, %v295
      %v297 = vrot.slane %v296, 2
      %v298 = vadd.f32 %v296, %v297
      %v299 = vrot.slane %v298, 1
      %v300 = vadd.f32 %v298, %v299
      %v301 = vadd.f32 %v300, 0.0
      %v302 = vadd.f32 %v174, %v175
      %v303 = vadd.f32 %v302, %v176
      %v304 = vadd.f32 %v303, %v177
      %v305 = vrot.slane %v304, 4
      %v306 = vadd.f32 %v304, %v305
      %v307 = vrot.slane %v306, 2
      %v308 = vadd.f32 %v306, %v307
      %v309 = vrot.slane %v308, 1
      %v310 = vadd.f32 %v308, %v309
      %v311 = vadd.f32 %v310, 0.0
      %v312 = vadd.f32 %v182, %v183
      %v313 = vadd.f32 %v312, %v184
      %v314 = vadd.f32 %v313, %v185
      %v315 = vrot.slane %v314, 4
      %v316 = vadd.f32 %v314, %v315
      %v317 = vrot.slane %v316, 2
      %v318 = vadd.f32 %v316, %v317
      %v319 = vrot.slane %v318, 1
      %v320 = vadd.f32 %v318, %v319
      %v321 = vadd.f32 %v320, 0.0
      %322 = vst [vmem:[%s160] sm:$0x1] %v251
      %323 = vst [vmem:[%s160 + $0x1] sm:$0x1] %v261
      %324 = vst [vmem:[%s160 + $0x2] sm:$0x1] %v271
      %325 = vst [vmem:[%s160 + $0x3] sm:$0x1] %v281
      %326 = vst [vmem:[%s160 + $0x4] sm:$0x1] %v291
      %327 = vst [vmem:[%s160 + $0x5] sm:$0x1] %v301
      %328 = vst [vmem:[%s160 + $0x6] sm:$0x1] %v311
      %329 = vst [vmem:[%s160 + $0x7] sm:$0x1] %v321
      %p330 = scmp.lt.s32.totalorder %s13, 4
      %s331 = scalar_select %p330, %s13, 4
      %s332 = smul.addr %s331, 8
      %s333 = scalar_lea.vmem %s2, %s332
      // Predicated region
      $region29: #{minmax_tpauc_loss.1} parent=27 // pred_check
        %p334 = pneg %p83
      $region30: #{minmax_tpauc_loss.1} parent=27 // pred_check_branch
        %336 = sbr.rel (%p334) target = $region32
      $region31: #{minmax_tpauc_loss.1} parent=27 // pred_region
        _
      $region32: #{minmax_tpauc_loss.1} parent=27 // pred_fallthru
        _
    $region28: #{minmax_tpauc_loss.1} parent=5 // pred_fallthru
      _
    %p337 = scmp.le.s32.totalorder 2, %s8
    // Predicated region
    $region33: #{minmax_tpauc_loss.1} parent=5 // pred_check
      %p338 = pneg %p337
    $region34: #{minmax_tpauc_loss.1} parent=5 // pred_check_branch
      %340 = sbr.rel (%p338) target = $region36
    $region35: #{minmax_tpauc_loss.1} parent=5 // pred_region
      %s341 = ssub.s32 %s8, 2
      // Predicated region
      $region37: #{minmax_tpauc_loss.1} parent=35 // pred_check
        %p342 = pneg %p89
      $region38: #{minmax_tpauc_loss.1} parent=35 // pred_check_branch
        %344 = sbr.rel (%p342) target = $region40
      $region39: #{minmax_tpauc_loss.1} parent=35 // pred_region
        %p345 = scmp.lt.s32.totalorder %s14, 4
        %s346 = scalar_select %p345, %s14, 4
        %s347 = smul.addr %s346, 8
        %s348 = scalar_lea.vmem %s2, %s347
      $region40: #{minmax_tpauc_loss.1} parent=35 // pred_fallthru
        _
    $region36: #{minmax_tpauc_loss.1} parent=5 // pred_fallthru
      _
  $region6: #{minmax_tpauc_loss.1} parent=0 // loop_footer
    %s12 = sadd.s32 1, %s8
  $region7: #{minmax_tpauc_loss.1} parent=0 // loop_footer_branch
    %7 = sbr.rel target = $region3
  $region8: #{minmax_tpauc_loss.1} parent=0 // loop_exit
    _

</llo_original>
